<compile_context>
chip_gen: v7x
topology: tpu7x:2x2x1
jax: 0.10.0
libtpu: 0.0.40
codegen_flags: <defaults>
</compile_context>

<pallas_src>
import functools

import jax
import jax.numpy as jnp
from jax.experimental import pallas as pl
from jax.experimental.pallas import tpu as pltpu


def encoder_cls_kernel(x_ref, m_ref,
                       w1_ref, b1_ref, w2_ref, b2_ref, w3_ref, b3_ref,
                       sp_ref, qp_ref, sn_ref, qn_ref):
    """Fused 3x(1x1conv+BN+ReLU) + streaming masked pos/neg sum & sum-of-squares.

    x_ref : (1, C, THW)  activations (channels on sublanes, spatial on lanes)
    m_ref : (1, 1, THW)  bf16 class map: +1 = positive, -1 = negative, 0 = none
    wK/bK : (L, C|L) / (L, 1) BN-folded (transposed) weights and biases
    outputs (accumulated across the innermost grid axis):
      sp/qp : (1, 1, L, 128) lane-wide partial sum / sum-of-squares (positives)
      sn/qn : (1, 1, L, 128) lane-wide partial sum / sum-of-squares (negatives)
    """
    t = pl.program_id(2)

    @pl.when(t == 0)
    def _():
        sp_ref[...] = jnp.zeros_like(sp_ref)
        qp_ref[...] = jnp.zeros_like(qp_ref)
        sn_ref[...] = jnp.zeros_like(sn_ref)
        qn_ref[...] = jnp.zeros_like(qn_ref)

    # 1x1 conv == channel matmul (BN scale pre-folded on host) + bias + ReLU.
    # x is consumed in its native dtype: bf16 feeds the MXU directly (no VPU
    # upcast pass); accumulation is always f32.
    x = x_ref[0]                                                    # (C, THW)
    h = jnp.maximum(
        jnp.dot(w1_ref[...], x, preferred_element_type=jnp.float32)
        + b1_ref[...], 0.0)
    h = jnp.maximum(
        jnp.dot(w2_ref[...], h, preferred_element_type=jnp.float32)
        + b2_ref[...], 0.0)
    h = jnp.maximum(
        jnp.dot(w3_ref[...], h, preferred_element_type=jnp.float32)
        + b3_ref[...], 0.0)                                         # (L, THW)
    # TODO(synk): for tiny production L/C (~8) the MXU is <1% utilized; a VPU
    # broadcast-FMA form of the 1x1 convs would skip the MXU push/pop latency.

    m = m_ref[0]                                                    # (1, THW) in {+1,-1,0}

    n_lat, thw = h.shape
    nchunk = thw // 128                                             # static; thw % 128 == 0

    # Streaming accumulation over 128-lane chunks: the masked (L, THW)
    # intermediates of the previous version (the VMEM-spill / vst hotspot)
    # are never materialized -- working set is a handful of vregs.
    sp = jnp.zeros((n_lat, 128), jnp.float32)
    qp = jnp.zeros((n_lat, 128), jnp.float32)
    sn = jnp.zeros((n_lat, 128), jnp.float32)
    qn = jnp.zeros((n_lat, 128), jnp.float32)
    for j in range(nchunk):                                         # aligned vreg slices
        lo = j * 128
        h_c = h[:, lo:lo + 128]                                     # (L, 128)
        m_c = m[:, lo:lo + 128].astype(jnp.float32)                 # (1, 128)
        mp_c = jnp.maximum(m_c, 0.0)                                # positive mask
        mn_c = mp_c - m_c                                           # negative mask (m in {+1,-1,0})
        hp_c = h_c * mp_c
        hn_c = h_c * mn_c
        sp = sp + hp_c
        qp = qp + hp_c * h_c
        sn = sn + hn_c
        qn = qn + hn_c * h_c

    sp_ref[...] += sp[None, None]
    qp_ref[...] += qp[None, None]
    sn_ref[...] += sn[None, None]
    qn_ref[...] += qn[None, None]


_DEFAULT_VMEM_CAP = 64 * 1024 * 1024  # assume v7x (smallest VMEM) if query fails


def _vmem_capacity_bytes():
    try:
        return int(pltpu.get_tpu_info().vmem_capacity_bytes)
    except Exception:  # non-TPU backend / older jax: be conservative
        return _DEFAULT_VMEM_CAP


def _plan_tiles(hw, c, l, x_itemsize, m_itemsize, tile_hw=None, target_lanes=8192):
    """Pick the lane-tile size and the scoped-VMEM limit from the chip's budget.

    Per-lane VMEM estimate: double-buffered x tile + double-buffered class map
    + up to three live f32 (L, tile) feature maps during the conv chain.
    """
    cap = _vmem_capacity_bytes()
    per_lane = 2 * c * x_itemsize + 2 * m_itemsize + 3 * l * 4
    if tile_hw is None:
        budget = cap // 2                     # leave headroom for compiler scratch
        max_lanes = max(128, min(target_lanes, (budget // per_lane) // 128 * 128))
        t = min(hw, max_lanes)
        t -= t % 128
        while t > 128 and hw % t:             # largest divisor of hw that fits
            t -= 128
        tile_hw = t if (t >= 128 and hw % t == 0) else 128
    est = tile_hw * per_lane + 8 * l * 128 * 4 + (2 << 20)   # + accumulators + slack
    vmem_limit = int(min(cap * 0.75, max(3 * est, 32 * 1024 * 1024)))
    return tile_hw, vmem_limit


def _full_spec(shape):
    zeros = (0,) * len(shape)
    return pl.BlockSpec(shape, lambda b, p, t: zeros)


@functools.partial(jax.jit, static_argnames=("tile_hw", "n_par", "vmem_limit"))
def _encoder_cls_call(hidden_map, label_cls, params, tile_hw, n_par, vmem_limit):
    B, C, H, W = hidden_map.shape
    L = params["w1"].shape[1]
    HW = H * W
    num_tiles = HW // tile_hw
    t_per_p = num_tiles // n_par

    # NCHW consumed directly: free reshape (no transpose, no copy).
    x3 = hidden_map.reshape(B, C, HW)
    x_dtype = hidden_map.dtype

    # Fold BatchNorm scale into the conv weights and pre-transpose so the
    # kernel computes h = relu(W^T @ x + b). Layer-1 weights match the
    # activation dtype so bf16 inputs hit the MXU without an upcast pass.
    w1t = (params["w1"] * params["s1"]).T.astype(x_dtype)          # (L, C)
    w2t = (params["w2"] * params["s2"]).T.astype(jnp.float32)      # (L, L)
    w3t = (params["w3"] * params["s3"]).T.astype(jnp.float32)      # (L, L)
    b1 = params["b1"].reshape(L, 1).astype(jnp.float32)
    b2 = params["b2"].reshape(L, 1).astype(jnp.float32)
    b3 = params["b3"].reshape(L, 1).astype(jnp.float32)

    # get_positive_map: pos = any(label==1); neg = any(label>=0) & ~pos.
    # TODO(synk): for very small C this map could be computed in-kernel from a
    # streamed label tile to save one HBM round trip.
    pos_map = jnp.any(label_cls == 1, axis=1)                      # (B, H, W)
    neg_map = jnp.any(label_cls >= 0, axis=1) & jnp.logical_not(pos_map)
    n_pos = jnp.sum(pos_map).astype(jnp.float32)
    n_neg = jnp.sum(neg_map).astype(jnp.float32)
    # Single packed bf16 map: +1 positive, -1 negative, 0 neither (lane dense).
    cls_map = (pos_map.astype(jnp.float32) - neg_map.astype(jnp.float32))
    cls_map = cls_map.reshape(B, 1, HW).astype(jnp.bfloat16)

    out_sd = jax.ShapeDtypeStruct((B, n_par, L, 128), jnp.float32)
    acc_spec = pl.BlockSpec((1, 1, L, 128), lambda b, p, t: (b, p, 0, 0))
    x_spec = pl.BlockSpec((1, C, tile_hw),
                          lambda b, p, t, _n=t_per_p: (b, 0, p * _n + t))
    m_spec = pl.BlockSpec((1, 1, tile_hw),
                          lambda b, p, t, _n=t_per_p: (b, 0, p * _n + t))

    sp, qp, sn, qn = pl.pallas_call(
        encoder_cls_kernel,
        out_shape=(out_sd, out_sd, out_sd, out_sd),
        grid_spec=pltpu.PrefetchScalarGridSpec(
            num_scalar_prefetch=0,
            grid=(B, n_par, t_per_p),
            in_specs=[
                x_spec, m_spec,
                _full_spec((L, C)), _full_spec((L, 1)),
                _full_spec((L, L)), _full_spec((L, 1)),
                _full_spec((L, L)), _full_spec((L, 1)),
            ],
            out_specs=[acc_spec, acc_spec, acc_spec, acc_spec],
        ),
        compiler_params=pltpu.CompilerParams(
            dimension_semantics=("parallel", "parallel", "arbitrary"),
            vmem_limit_bytes=vmem_limit),
    )(x3, cls_map, w1t, b1, w2t, b2, w3t, b3)

    # Epilogue in JAX: combine per-(batch, split) lane-wide partials, compute
    # masked mean / unbiased std for each class.
    sum_pos = jnp.sum(sp, axis=(0, 1, 3))                          # (L,)
    sq_pos = jnp.sum(qp, axis=(0, 1, 3))
    sum_neg = jnp.sum(sn, axis=(0, 1, 3))
    sq_neg = jnp.sum(qn, axis=(0, 1, 3))

    def _mean(s, n):
        return jnp.where(n > 0.0, s / jnp.maximum(n, 1.0), 0.0)

    def _std(s, q, n):
        # unbiased (correction=1) via sum-of-squares; see TODO on cancellation.
        var = (q - s * s / jnp.maximum(n, 1.0)) / jnp.maximum(n - 1.0, 1.0)
        return jnp.where(n > 1.0, jnp.sqrt(jnp.maximum(var, 0.0)), 0.0)

    mean_pos = _mean(sum_pos, n_pos)
    mean_neg = _mean(sum_neg, n_neg)   # torch would NaN on empty neg; we return 0
    std_pos = _std(sum_pos, sq_pos, n_pos)
    std_neg = _std(sum_neg, sq_neg, n_neg)

    # torch order: cat(cat(mean_pos, mean_neg), cat(std_pos, std_neg))
    mu = jnp.concatenate([mean_pos, mean_neg, std_pos, std_neg])
    latents = mu.reshape(1, 4 * L, 1, 1)
    kl = 0.0                                                       # PossiblySample unused
    s1 = (B, L, H, W)                                              # shape of `mus`
    return latents, kl, s1


def encoder_cls_forward(hidden_map, label_cls, params, tile_hw=None):
    B, C, H, W = hidden_map.shape
    L = params["w1"].shape[1]
    HW = H * W
    assert HW % 128 == 0, "TODO(synk): H*W not a multiple of 128 unsupported"
    assert C % 8 == 0 and L % 8 == 0, "channel dims must be multiples of 8"

    x_itemsize = jnp.dtype(hidden_map.dtype).itemsize
    tile_hw, vmem_limit = _plan_tiles(HW, C, L, x_itemsize, 2, tile_hw=tile_hw)
    assert tile_hw % 128 == 0 and HW % tile_hw == 0, (tile_hw, HW)

    num_tiles = HW // tile_hw
    # 2-way parallel spatial split so B==1 still covers both v7x TensorCores.
    n_par = 2 if (num_tiles >= 2 and num_tiles % 2 == 0) else 1

    return _encoder_cls_call(hidden_map, label_cls, params,
                             tile_hw=tile_hw, n_par=n_par, vmem_limit=vmem_limit)


def _make_params(key, c_in, n_latent):
    """Deterministic synthetic params: conv weights + folded BatchNorm."""
    eps = 1e-5
    params = {}
    dims = [(c_in, n_latent), (n_latent, n_latent), (n_latent, n_latent)]
    for idx, (ci, co) in enumerate(dims, start=1):
        key, k_w, k_g, k_b, k_m, k_v = jax.random.split(key, 6)
        w = jax.random.normal(k_w, (ci, co), jnp.float32) * (1.0 / jnp.sqrt(ci))
        gamma = jax.random.uniform(k_g, (1, co), jnp.float32, 0.5, 1.5)
        beta = jax.random.normal(k_b, (1, co), jnp.float32) * 0.1
        r_mean = jax.random.normal(k_m, (1, co), jnp.float32) * 0.1
        r_var = jax.random.uniform(k_v, (1, co), jnp.float32, 0.5, 1.5)
        scale = gamma / jnp.sqrt(r_var + eps)
        bias = beta - r_mean * scale
        params[f"w{idx}"] = w
        params[f"s{idx}"] = scale
        params[f"b{idx}"] = bias
    return params


def _reference_forward(hidden_map, label_cls, params):
    """Pure-JAX reference mirroring the PyTorch EncoderCls semantics."""
    B, C, H, W = hidden_map.shape
    L = params["w1"].shape[1]
    x = jnp.transpose(hidden_map, (0, 2, 3, 1)).reshape(-1, C).astype(jnp.float32)
    h = jnp.maximum(x @ params["w1"] * params["s1"] + params["b1"], 0.0)
    h = jnp.maximum(h @ params["w2"] * params["s2"] + params["b2"], 0.0)
    h = jnp.maximum(h @ params["w3"] * params["s3"] + params["b3"], 0.0)
    pos = jnp.any(label_cls == 1, axis=1).reshape(-1)
    neg = jnp.any(label_cls >= 0, axis=1).reshape(-1) & jnp.logical_not(pos)

    def stats(mask):
        mf = mask.astype(jnp.float32)[:, None]
        n = jnp.sum(mf)
        mean = jnp.where(n > 0, jnp.sum(h * mf, axis=0) / jnp.maximum(n, 1.0), 0.0)
        d = (h - mean[None, :]) * mf
        var = jnp.sum(d * d, axis=0) / jnp.maximum(n - 1.0, 1.0)
        std = jnp.where(n > 1, jnp.sqrt(var), 0.0)
        return mean, std

    mean_p, std_p = stats(pos)
    mean_n, std_n = stats(neg)
    mu = jnp.concatenate([mean_p, mean_n, std_p, std_n])
    return mu.reshape(1, 4 * L, 1, 1)


if __name__ == "__main__":
    B, C_IN, H, W = 2, 8, 16, 16
    N_LATENT = 8
    K_CLS = 2

    key = jax.random.PRNGKey(0)
    k_x, k_lbl, k_p = jax.random.split(key, 3)
    hidden_map = jax.random.normal(k_x, (B, C_IN, H, W), jnp.float32)
    # label_cls in {0, 1, 2}; channel dim K_CLS (reduced over in get_positive_map)
    label_cls = jax.random.randint(k_lbl, (B, K_CLS, H, W), 0, 3)
    params = _make_params(k_p, C_IN, N_LATENT)

    ref = _reference_forward(hidden_map, label_cls, params)

    # 1) f32, small explicit tile -> exercises multi-tile accumulation + the
    #    2-way parallel spatial split.
    latents, kl, s1 = encoder_cls_forward(hidden_map, label_cls, params, tile_hw=128)
    latents = jax.block_until_ready(latents)
    assert latents.shape == (1, 4 * N_LATENT, 1, 1), latents.shape
    assert s1 == (B, N_LATENT, H, W), s1
    assert jnp.allclose(latents, ref, atol=1e-3, rtol=1e-3), (
        float(jnp.max(jnp.abs(latents - ref))))

    # 2) f32, auto (VMEM-budgeted) tile.
    latents2, _, _ = encoder_cls_forward(hidden_map, label_cls, params)
    latents2 = jax.block_until_ready(latents2)
    assert jnp.allclose(latents2, ref, atol=1e-3, rtol=1e-3), (
        float(jnp.max(jnp.abs(latents2 - ref))))

    # 3) bf16 activations: no in-kernel upcast, layer-1 matmul runs natively
    #    in bf16 on the MXU (f32 accumulation).
    latents_bf16, _, _ = encoder_cls_forward(
        hidden_map.astype(jnp.bfloat16), label_cls, params)
    latents_bf16 = jax.block_until_ready(latents_bf16)
    assert jnp.allclose(latents_bf16, ref, atol=5e-2, rtol=5e-2), (
        float(jnp.max(jnp.abs(latents_bf16 - ref))))

    print("KERNEL_OK")
</pallas_src>

<mosaic_0001>
module attributes {stable_mosaic.version = 11 : i64} {
  func.func @encoder_cls_kernel(%arg0: i32, %arg1: i32, %arg2: i32, %arg3: memref<1x8x128xf32, #tpu.memory_space<vmem>>, %arg4: memref<1x1x128xbf16, #tpu.memory_space<vmem>>, %arg5: memref<8x8xf32, #tpu.memory_space<vmem>>, %arg6: memref<8x1xf32, #tpu.memory_space<vmem>>, %arg7: memref<8x8xf32, #tpu.memory_space<vmem>>, %arg8: memref<8x1xf32, #tpu.memory_space<vmem>>, %arg9: memref<8x8xf32, #tpu.memory_space<vmem>>, %arg10: memref<8x1xf32, #tpu.memory_space<vmem>>, %arg11: memref<1x1x8x128xf32, #tpu.memory_space<vmem>>, %arg12: memref<1x1x8x128xf32, #tpu.memory_space<vmem>>, %arg13: memref<1x1x8x128xf32, #tpu.memory_space<vmem>>, %arg14: memref<1x1x8x128xf32, #tpu.memory_space<vmem>>) attributes {dimension_semantics = [#tpu.dimension_semantics<parallel>, #tpu.dimension_semantics<parallel>, #tpu.dimension_semantics<arbitrary>], iteration_bounds = array<i64: 2, 2, 1>, scalar_prefetch = 0 : i64, scratch_operands = 0 : i64, tpu.core_type = #tpu.core_type<tc>, window_params = [{transform_indices = @transform_0, window_bounds = array<i64: 1, 8, 128>}, {transform_indices = @transform_1, window_bounds = array<i64: 1, 1, 128>}, {pipeline_mode = #tpu.pipeline_mode<synchronous>, transform_indices = @transform_2, window_bounds = array<i64: 8, 8>}, {pipeline_mode = #tpu.pipeline_mode<synchronous>, transform_indices = @transform_3, window_bounds = array<i64: 8, 1>}, {pipeline_mode = #tpu.pipeline_mode<synchronous>, transform_indices = @transform_4, window_bounds = array<i64: 8, 8>}, {pipeline_mode = #tpu.pipeline_mode<synchronous>, transform_indices = @transform_5, window_bounds = array<i64: 8, 1>}, {pipeline_mode = #tpu.pipeline_mode<synchronous>, transform_indices = @transform_6, window_bounds = array<i64: 8, 8>}, {pipeline_mode = #tpu.pipeline_mode<synchronous>, transform_indices = @transform_7, window_bounds = array<i64: 8, 1>}, {transform_indices = @transform_8, window_bounds = array<i64: 1, 1, 8, 128>}, {transform_indices = @transform_9, window_bounds = array<i64: 1, 1, 8, 128>}, {transform_indices = @transform_10, window_bounds = array<i64: 1, 1, 8, 128>}, {transform_indices = @transform_11, window_bounds = array<i64: 1, 1, 8, 128>}]} {
    %c0_i32 = arith.constant 0 : i32
    %0 = arith.cmpi eq, %arg2, %c0_i32 : i32
    %1 = arith.extui %0 : i1 to i32
    %c0_i32_0 = arith.constant 0 : i32
    %2 = arith.cmpi ne, %1, %c0_i32_0 : i32
    scf.if %2 {
      %cst_60 = arith.constant 0.000000e+00 : f32
      %62 = vector.broadcast %cst_60 : f32 to vector<1x1x8x128xf32>
      %c0_61 = arith.constant 0 : index
      %c0_62 = arith.constant 0 : index
      %c0_63 = arith.constant 0 : index
      %c0_64 = arith.constant 0 : index
      %63 = vector.load %arg11[%c0_61, %c0_62, %c0_63, %c0_64] : memref<1x1x8x128xf32, #tpu.memory_space<vmem>>, vector<1x1x8x128xf32>
      tpu.vector_store %arg11[%c0_61, %c0_62, %c0_63, %c0_64], %62 {strides = array<i32>} : memref<1x1x8x128xf32, #tpu.memory_space<vmem>>, vector<1x1x8x128xf32>,
      %cst_65 = arith.constant 0.000000e+00 : f32
      %64 = vector.broadcast %cst_65 : f32 to vector<1x1x8x128xf32>
      %c0_66 = arith.constant 0 : index
      %c0_67 = arith.constant 0 : index
      %c0_68 = arith.constant 0 : index
      %c0_69 = arith.constant 0 : index
      %65 = vector.load %arg12[%c0_66, %c0_67, %c0_68, %c0_69] : memref<1x1x8x128xf32, #tpu.memory_space<vmem>>, vector<1x1x8x128xf32>
      tpu.vector_store %arg12[%c0_66, %c0_67, %c0_68, %c0_69], %64 {strides = array<i32>} : memref<1x1x8x128xf32, #tpu.memory_space<vmem>>, vector<1x1x8x128xf32>,
      %cst_70 = arith.constant 0.000000e+00 : f32
      %66 = vector.broadcast %cst_70 : f32 to vector<1x1x8x128xf32>
      %c0_71 = arith.constant 0 : index
      %c0_72 = arith.constant 0 : index
      %c0_73 = arith.constant 0 : index
      %c0_74 = arith.constant 0 : index
      %67 = vector.load %arg13[%c0_71, %c0_72, %c0_73, %c0_74] : memref<1x1x8x128xf32, #tpu.memory_space<vmem>>, vector<1x1x8x128xf32>
      tpu.vector_store %arg13[%c0_71, %c0_72, %c0_73, %c0_74], %66 {strides = array<i32>} : memref<1x1x8x128xf32, #tpu.memory_space<vmem>>, vector<1x1x8x128xf32>,
      %cst_75 = arith.constant 0.000000e+00 : f32
      %68 = vector.broadcast %cst_75 : f32 to vector<1x1x8x128xf32>
      %c0_76 = arith.constant 0 : index
      %c0_77 = arith.constant 0 : index
      %c0_78 = arith.constant 0 : index
      %c0_79 = arith.constant 0 : index
      %69 = vector.load %arg14[%c0_76, %c0_77, %c0_78, %c0_79] : memref<1x1x8x128xf32, #tpu.memory_space<vmem>>, vector<1x1x8x128xf32>
      tpu.vector_store %arg14[%c0_76, %c0_77, %c0_78, %c0_79], %68 {strides = array<i32>} : memref<1x1x8x128xf32, #tpu.memory_space<vmem>>, vector<1x1x8x128xf32>,
    } else {
    }
    %c0 = arith.constant 0 : index
    %c0_1 = arith.constant 0 : index
    %c0_2 = arith.constant 0 : index
    %3 = vector.load %arg3[%c0, %c0_1, %c0_2] : memref<1x8x128xf32, #tpu.memory_space<vmem>>, vector<1x8x128xf32>
    %4 = vector.shape_cast %3 : vector<1x8x128xf32> to vector<8x128xf32>
    %c0_3 = arith.constant 0 : index
    %c0_4 = arith.constant 0 : index
    %5 = vector.load %arg5[%c0_3, %c0_4] : memref<8x8xf32, #tpu.memory_space<vmem>>, vector<8x8xf32>
    %cst = arith.constant dense<0.000000e+00> : vector<8x128xf32>
    %6 = tpu.matmul %5, %4, %cst {dimension_numbers = #tpu.dot_dimension_numbers<[1], [0], [0], [1], [0, 0, 1, 1], [], []>} : vector<8x8xf32>, vector<8x128xf32>, vector<8x128xf32> -> vector<8x128xf32>
    %c0_5 = arith.constant 0 : index
    %c0_6 = arith.constant 0 : index
    %7 = vector.load %arg6[%c0_5, %c0_6] : memref<8x1xf32, #tpu.memory_space<vmem>>, vector<8x1xf32>
    %8 = vector.broadcast %7 : vector<8x1xf32> to vector<8x128xf32>
    %9 = arith.addf %6, %8 : vector<8x128xf32>
    %cst_7 = arith.constant 0.000000e+00 : f32
    %10 = vector.broadcast %cst_7 : f32 to vector<8x128xf32>
    %11 = arith.maximumf %9, %10 : vector<8x128xf32>
    %c0_8 = arith.constant 0 : index
    %c0_9 = arith.constant 0 : index
    %12 = vector.load %arg7[%c0_8, %c0_9] : memref<8x8xf32, #tpu.memory_space<vmem>>, vector<8x8xf32>
    %cst_10 = arith.constant dense<0.000000e+00> : vector<8x128xf32>
    %13 = tpu.matmul %12, %11, %cst_10 {dimension_numbers = #tpu.dot_dimension_numbers<[1], [0], [0], [1], [0, 0, 1, 1], [], []>} : vector<8x8xf32>, vector<8x128xf32>, vector<8x128xf32> -> vector<8x128xf32>
    %c0_11 = arith.constant 0 : index
    %c0_12 = arith.constant 0 : index
    %14 = vector.load %arg8[%c0_11, %c0_12] : memref<8x1xf32, #tpu.memory_space<vmem>>, vector<8x1xf32>
    %15 = vector.broadcast %14 : vector<8x1xf32> to vector<8x128xf32>
    %16 = arith.addf %13, %15 : vector<8x128xf32>
    %cst_13 = arith.constant 0.000000e+00 : f32
    %17 = vector.broadcast %cst_13 : f32 to vector<8x128xf32>
    %18 = arith.maximumf %16, %17 : vector<8x128xf32>
    %c0_14 = arith.constant 0 : index
    %c0_15 = arith.constant 0 : index
    %19 = vector.load %arg9[%c0_14, %c0_15] : memref<8x8xf32, #tpu.memory_space<vmem>>, vector<8x8xf32>
    %cst_16 = arith.constant dense<0.000000e+00> : vector<8x128xf32>
    %20 = tpu.matmul %19, %18, %cst_16 {dimension_numbers = #tpu.dot_dimension_numbers<[1], [0], [0], [1], [0, 0, 1, 1], [], []>} : vector<8x8xf32>, vector<8x128xf32>, vector<8x128xf32> -> vector<8x128xf32>
    %c0_17 = arith.constant 0 : index
    %c0_18 = arith.constant 0 : index
    %21 = vector.load %arg10[%c0_17, %c0_18] : memref<8x1xf32, #tpu.memory_space<vmem>>, vector<8x1xf32>
    %22 = vector.broadcast %21 : vector<8x1xf32> to vector<8x128xf32>
    %23 = arith.addf %20, %22 : vector<8x128xf32>
    %cst_19 = arith.constant 0.000000e+00 : f32
    %24 = vector.broadcast %cst_19 : f32 to vector<8x128xf32>
    %25 = arith.maximumf %23, %24 : vector<8x128xf32>
    %c0_20 = arith.constant 0 : index
    %c0_21 = arith.constant 0 : index
    %c0_22 = arith.constant 0 : index
    %26 = vector.load %arg4[%c0_20, %c0_21, %c0_22] : memref<1x1x128xbf16, #tpu.memory_space<vmem>>, vector<1x1x128xbf16>
    %27 = vector.shape_cast %26 : vector<1x1x128xbf16> to vector<1x128xbf16>
    %cst_23 = arith.constant 0.000000e+00 : f32
    %28 = vector.broadcast %cst_23 : f32 to vector<8x128xf32>
    %cst_24 = arith.constant 0.000000e+00 : f32
    %29 = vector.broadcast %cst_24 : f32 to vector<8x128xf32>
    %cst_25 = arith.constant 0.000000e+00 : f32
    %30 = vector.broadcast %cst_25 : f32 to vector<8x128xf32>
    %cst_26 = arith.constant 0.000000e+00 : f32
    %31 = vector.broadcast %cst_26 : f32 to vector<8x128xf32>
    %32 = arith.extf %27 : vector<1x128xbf16> to vector<1x128xf32>
    %cst_27 = arith.constant 0.000000e+00 : f32
    %33 = vector.broadcast %cst_27 : f32 to vector<1x128xf32>
    %34 = arith.maximumf %32, %33 : vector<1x128xf32>
    %35 = arith.subf %34, %32 : vector<1x128xf32>
    %36 = vector.broadcast %34 : vector<1x128xf32> to vector<8x128xf32>
    %37 = arith.mulf %25, %36 : vector<8x128xf32>
    %38 = vector.broadcast %35 : vector<1x128xf32> to vector<8x128xf32>
    %39 = arith.mulf %25, %38 : vector<8x128xf32>
    %40 = arith.addf %28, %37 : vector<8x128xf32>
    %41 = arith.mulf %37, %25 : vector<8x128xf32>
    %42 = arith.addf %29, %41 : vector<8x128xf32>
    %43 = arith.addf %30, %39 : vector<8x128xf32>
    %44 = arith.mulf %39, %25 : vector<8x128xf32>
    %45 = arith.addf %31, %44 : vector<8x128xf32>
    %c0_28 = arith.constant 0 : index
    %c0_29 = arith.constant 0 : index
    %c0_30 = arith.constant 0 : index
    %c0_31 = arith.constant 0 : index
    %46 = vector.load %arg11[%c0_28, %c0_29, %c0_30, %c0_31] : memref<1x1x8x128xf32, #tpu.memory_space<vmem>>, vector<1x1x8x128xf32>
    %47 = vector.shape_cast %40 : vector<8x128xf32> to vector<1x1x8x128xf32>
    %48 = arith.addf %46, %47 : vector<1x1x8x128xf32>
    %c0_32 = arith.constant 0 : index
    %c0_33 = arith.constant 0 : index
    %c0_34 = arith.constant 0 : index
    %c0_35 = arith.constant 0 : index
    %49 = vector.load %arg11[%c0_32, %c0_33, %c0_34, %c0_35] : memref<1x1x8x128xf32, #tpu.memory_space<vmem>>, vector<1x1x8x128xf32>
    tpu.vector_store %arg11[%c0_32, %c0_33, %c0_34, %c0_35], %48 {strides = array<i32>} : memref<1x1x8x128xf32, #tpu.memory_space<vmem>>, vector<1x1x8x128xf32>,
    %c0_36 = arith.constant 0 : index
    %c0_37 = arith.constant 0 : index
    %c0_38 = arith.constant 0 : index
    %c0_39 = arith.constant 0 : index
    %50 = vector.load %arg12[%c0_36, %c0_37, %c0_38, %c0_39] : memref<1x1x8x128xf32, #tpu.memory_space<vmem>>, vector<1x1x8x128xf32>
    %51 = vector.shape_cast %42 : vector<8x128xf32> to vector<1x1x8x128xf32>
    %52 = arith.addf %50, %51 : vector<1x1x8x128xf32>
    %c0_40 = arith.constant 0 : index
    %c0_41 = arith.constant 0 : index
    %c0_42 = arith.constant 0 : index
    %c0_43 = arith.constant 0 : index
    %53 = vector.load %arg12[%c0_40, %c0_41, %c0_42, %c0_43] : memref<1x1x8x128xf32, #tpu.memory_space<vmem>>, vector<1x1x8x128xf32>
    tpu.vector_store %arg12[%c0_40, %c0_41, %c0_42, %c0_43], %52 {strides = array<i32>} : memref<1x1x8x128xf32, #tpu.memory_space<vmem>>, vector<1x1x8x128xf32>,
    %c0_44 = arith.constant 0 : index
    %c0_45 = arith.constant 0 : index
    %c0_46 = arith.constant 0 : index
    %c0_47 = arith.constant 0 : index
    %54 = vector.load %arg13[%c0_44, %c0_45, %c0_46, %c0_47] : memref<1x1x8x128xf32, #tpu.memory_space<vmem>>, vector<1x1x8x128xf32>
    %55 = vector.shape_cast %43 : vector<8x128xf32> to vector<1x1x8x128xf32>
    %56 = arith.addf %54, %55 : vector<1x1x8x128xf32>
    %c0_48 = arith.constant 0 : index
    %c0_49 = arith.constant 0 : index
    %c0_50 = arith.constant 0 : index
    %c0_51 = arith.constant 0 : index
    %57 = vector.load %arg13[%c0_48, %c0_49, %c0_50, %c0_51] : memref<1x1x8x128xf32, #tpu.memory_space<vmem>>, vector<1x1x8x128xf32>
    tpu.vector_store %arg13[%c0_48, %c0_49, %c0_50, %c0_51], %56 {strides = array<i32>} : memref<1x1x8x128xf32, #tpu.memory_space<vmem>>, vector<1x1x8x128xf32>,
    %c0_52 = arith.constant 0 : index
    %c0_53 = arith.constant 0 : index
    %c0_54 = arith.constant 0 : index
    %c0_55 = arith.constant 0 : index
    %58 = vector.load %arg14[%c0_52, %c0_53, %c0_54, %c0_55] : memref<1x1x8x128xf32, #tpu.memory_space<vmem>>, vector<1x1x8x128xf32>
    %59 = vector.shape_cast %45 : vector<8x128xf32> to vector<1x1x8x128xf32>
    %60 = arith.addf %58, %59 : vector<1x1x8x128xf32>
    %c0_56 = arith.constant 0 : index
    %c0_57 = arith.constant 0 : index
    %c0_58 = arith.constant 0 : index
    %c0_59 = arith.constant 0 : index
    %61 = vector.load %arg14[%c0_56, %c0_57, %c0_58, %c0_59] : memref<1x1x8x128xf32, #tpu.memory_space<vmem>>, vector<1x1x8x128xf32>
    tpu.vector_store %arg14[%c0_56, %c0_57, %c0_58, %c0_59], %60 {strides = array<i32>} : memref<1x1x8x128xf32, #tpu.memory_space<vmem>>, vector<1x1x8x128xf32>,
    return
  }
  func.func @transform_0(%arg0: i32, %arg1: i32, %arg2: i32) -> (i32, i32, i32) {
    %c1_i32 = arith.constant 1 : i32
    %0 = arith.muli %arg1, %c1_i32 : i32
    %1 = arith.addi %0, %arg2 : i32
    %c0_i32 = arith.constant 0 : i32
    %c0_i32_0 = arith.constant 0 : i32
    return %arg0, %c0_i32, %1 : i32, i32, i32
  }
  func.func @transform_1(%arg0: i32, %arg1: i32, %arg2: i32) -> (i32, i32, i32) {
    %c1_i32 = arith.constant 1 : i32
    %0 = arith.muli %arg1, %c1_i32 : i32
    %1 = arith.addi %0, %arg2 : i32
    %c0_i32 = arith.constant 0 : i32
    %c0_i32_0 = arith.constant 0 : i32
    return %arg0, %c0_i32, %1 : i32, i32, i32
  }
  func.func @transform_2(%arg0: i32, %arg1: i32, %arg2: i32) -> (i32, i32) {
    %c0_i32 = arith.constant 0 : i32
    %c0_i32_0 = arith.constant 0 : i32
    %c0_i32_1 = arith.constant 0 : i32
    return %c0_i32, %c0_i32_0 : i32, i32
  }
  func.func @transform_3(%arg0: i32, %arg1: i32, %arg2: i32) -> (i32, i32) {
    %c0_i32 = arith.constant 0 : i32
    %c0_i32_0 = arith.constant 0 : i32
    %c0_i32_1 = arith.constant 0 : i32
    return %c0_i32, %c0_i32_0 : i32, i32
  }
  func.func @transform_4(%arg0: i32, %arg1: i32, %arg2: i32) -> (i32, i32) {
    %c0_i32 = arith.constant 0 : i32
    %c0_i32_0 = arith.constant 0 : i32
    %c0_i32_1 = arith.constant 0 : i32
    return %c0_i32, %c0_i32_0 : i32, i32
  }
  func.func @transform_5(%arg0: i32, %arg1: i32, %arg2: i32) -> (i32, i32) {
    %c0_i32 = arith.constant 0 : i32
    %c0_i32_0 = arith.constant 0 : i32
    %c0_i32_1 = arith.constant 0 : i32
    return %c0_i32, %c0_i32_0 : i32, i32
  }
  func.func @transform_6(%arg0: i32, %arg1: i32, %arg2: i32) -> (i32, i32) {
    %c0_i32 = arith.constant 0 : i32
    %c0_i32_0 = arith.constant 0 : i32
    %c0_i32_1 = arith.constant 0 : i32
    return %c0_i32, %c0_i32_0 : i32, i32
  }
  func.func @transform_7(%arg0: i32, %arg1: i32, %arg2: i32) -> (i32, i32) {
    %c0_i32 = arith.constant 0 : i32
    %c0_i32_0 = arith.constant 0 : i32
    %c0_i32_1 = arith.constant 0 : i32
    return %c0_i32, %c0_i32_0 : i32, i32
  }
  func.func @transform_8(%arg0: i32, %arg1: i32, %arg2: i32) -> (i32, i32, i32, i32) {
    %c0_i32 = arith.constant 0 : i32
    %c0_i32_0 = arith.constant 0 : i32
    %c0_i32_1 = arith.constant 0 : i32
    return %arg0, %arg1, %c0_i32, %c0_i32_0 : i32, i32, i32, i32
  }
  func.func @transform_9(%arg0: i32, %arg1: i32, %arg2: i32) -> (i32, i32, i32, i32) {
    %c0_i32 = arith.constant 0 : i32
    %c0_i32_0 = arith.constant 0 : i32
    %c0_i32_1 = arith.constant 0 : i32
    return %arg0, %arg1, %c0_i32, %c0_i32_0 : i32, i32, i32, i32
  }
  func.func @transform_10(%arg0: i32, %arg1: i32, %arg2: i32) -> (i32, i32, i32, i32) {
    %c0_i32 = arith.constant 0 : i32
    %c0_i32_0 = arith.constant 0 : i32
    %c0_i32_1 = arith.constant 0 : i32
    return %arg0, %arg1, %c0_i32, %c0_i32_0 : i32, i32, i32, i32
  }
  func.func @transform_11(%arg0: i32, %arg1: i32, %arg2: i32) -> (i32, i32, i32, i32) {
    %c0_i32 = arith.constant 0 : i32
    %c0_i32_0 = arith.constant 0 : i32
    %c0_i32_1 = arith.constant 0 : i32
    return %arg0, %arg1, %c0_i32, %c0_i32_0 : i32, i32, i32, i32
  }
}

</mosaic_0001>

<llo_original>
// kernel: _encoder_cls_call.1
$region0: #{_encoder_cls_call.1}
  #allocation0 [shape = 'u32[]', space=smem, size = 0x4, offset = 0x4, fixed_abs, tag = 'smem constant byte address 0x4 - core index']
  #allocation1 [shape = 'u32[144,128]{1,0:T(1,128)}', space=vmem, size = 0x12000, scoped, tag = 'internal scratch']
  %s0 = inlined_call_operand.vmem [shape: f32[2,8,256], index: 0, kind: input, shape index: {}]
  %s1 = inlined_call_operand.vmem [shape: bf16[2,1,256], index: 1, kind: input, shape index: {}]
  %s2 = inlined_call_operand.vmem [shape: f32[8,8], index: 2, kind: input, shape index: {}]
  %s3 = inlined_call_operand.vmem [shape: f32[8,1], index: 3, kind: input, shape index: {}]
  %s4 = inlined_call_operand.vmem [shape: f32[8,8], index: 4, kind: input, shape index: {}]
  %s5 = inlined_call_operand.vmem [shape: f32[8,1], index: 5, kind: input, shape index: {}]
  %s6 = inlined_call_operand.vmem [shape: f32[8,8], index: 6, kind: input, shape index: {}]
  %s7 = inlined_call_operand.vmem [shape: f32[8,1], index: 7, kind: input, shape index: {}]
  %s8 = inlined_call_operand.vmem [shape: f32[2,2,8,128], index: 8, kind: output, shape index: {0}]
  %s9 = inlined_call_operand.vmem [shape: f32[2,2,8,128], index: 9, kind: output, shape index: {1}]
  %s10 = inlined_call_operand.vmem [shape: f32[2,2,8,128], index: 10, kind: output, shape index: {2}]
  %s11 = inlined_call_operand.vmem [shape: f32[2,2,8,128], index: 11, kind: output, shape index: {3}]
  %12 = xla_tuple %s8, %s9, %s10, %s11
  %s13 = sld [smem:[#allocation0]]
  $region93: #{_encoder_cls_call.1} parent=0
    _
  %s15 = ssub.s32 1, %s13
  %s16 = scalar_select 0, %s15, %s13
  loop: start=0, step=1, limit=6
  $region2: #{_encoder_cls_call.1} parent=0 // loop_pre_header
    _
  $region3: #{_encoder_cls_call.1} parent=0 // loop_header
    %s18 = sphi 0, %s22
    %p19 = scmp.ge.s32.totalorder %s18, 6
    %s25 = sphi 0, %s44
    %s26 = sphi 0, %s40
    %s27 = sphi 0, %s36
    %s28 = sphi 0, %s25
    %s29 = sphi 0, %s26
    %s30 = sphi 0, %s27
    %s31 = sphi 0, %s28
    %s32 = sphi 0, %s29
    %s33 = sphi 0, %s30
    %s51 = sphi 0, %s53
    %s54 = sphi 0, %s51
    %s55 = sphi 0, %s54
    %s71 = sphi 0, %s55
    %s81 = sphi 0, %s83
    %s84 = sphi 0, %s81
    %s85 = sphi 0, %s84
    %s101 = sphi 0, %s85
    %s105 = sphi 0, %s105
    %s107 = sphi 0, %s105
    %s108 = sphi 0, %s107
    %s122 = sphi 0, %s108
    %s126 = sphi 0, %s126
    %s128 = sphi 0, %s126
    %s129 = sphi 0, %s128
    %s143 = sphi 0, %s129
    %s147 = sphi 0, %s147
    %s149 = sphi 0, %s147
    %s150 = sphi 0, %s149
    %s164 = sphi 0, %s150
    %s168 = sphi 0, %s168
    %s170 = sphi 0, %s168
    %s171 = sphi 0, %s170
    %s185 = sphi 0, %s171
    %s189 = sphi 0, %s189
    %s191 = sphi 0, %s189
    %s192 = sphi 0, %s191
    %s206 = sphi 0, %s192
    %s210 = sphi 0, %s210
    %s212 = sphi 0, %s210
    %s213 = sphi 0, %s212
    %s227 = sphi 0, %s213
    %s235 = sphi 0, %s237
    %s238 = sphi 0, %s235
    %s239 = sphi 0, %s238
    %s255 = sphi 0, %s239
    %s263 = sphi 0, %s265
    %s266 = sphi 0, %s263
    %s267 = sphi 0, %s266
    %s283 = sphi 0, %s267
    %s291 = sphi 0, %s293
    %s294 = sphi 0, %s291
    %s295 = sphi 0, %s294
    %s311 = sphi 0, %s295
    %s319 = sphi 0, %s321
    %s322 = sphi 0, %s319
    %s323 = sphi 0, %s322
    %s339 = sphi 0, %s323
  $region4: #{_encoder_cls_call.1} parent=0 // loop_header_branch
    %21 = sbr.rel (%p19) target = $region8
  $region5: #{_encoder_cls_call.1} parent=0 // loop_body
    %s23 = ssub.s32 %s18, 1
    %s24 = ssub.s32 %s18, 2
    %s34 = sadd.s32 1, %s27
    %p35 = scmp.ge.s32.totalorder %s34, 1
    %s36 = scalar_select %p35, 0, %s34
    %s37 = sadd.s32 1, %s26
    %s38 = scalar_select %p35, %s37, %s26
    %p39 = scmp.ge.s32.totalorder %s38, 2
    %s40 = scalar_select %p39, 0, %s38
    %s41 = sadd.s32 1, %s25
    %s42 = scalar_select %p39, %s41, %s25
    %p43 = scmp.ge.s32.totalorder %s42, 2
    %s44 = scalar_select %p43, 0, %s42
    %s45 = sadd.s32 %s26, %s27
    %s46 = sadd.s32 %s40, %s36
    %s47 = ssub.s32 %s25, %s44
    %s48 = ssub.s32 %s45, %s46
    %s49 = sor.u32 %s47, %s48
    %p50 = scmp.eq.s32.totalorder %s49, 0
    %s52 = sadd.s32 %s51, 1
    %s53 = scalar_select %p50, %s51, %s52
    %p56 = pneg %p50
    %p57 = scmp.eq.s32.totalorder %s18, 3
    %p58 = por %p56, %p57
    %p59 = scmp.ne.s32.totalorder %s51, %s54
    %p60 = scmp.eq.s32.totalorder %s18, 0
    %p61 = por %p59, %p60
    %p62 = scmp.ne.s32.totalorder %s51, %s54
    %p63 = scmp.eq.s32.totalorder %s23, 3
    %p64 = por %p62, %p63
    %p65 = scmp.ne.s32.totalorder %s54, %s55
    %p66 = scmp.eq.s32.totalorder %s23, 0
    %p67 = por %p65, %p66
    %p68 = scmp.ne.s32.totalorder %s54, %s55
    %p69 = scmp.eq.s32.totalorder %s24, 3
    %p70 = por %p68, %p69
    %p72 = scmp.ne.s32.totalorder %s55, %s71
    %p73 = scmp.eq.s32.totalorder %s24, 0
    %p74 = por %p72, %p73
    %s75 = sadd.s32 %s26, %s27
    %s76 = sadd.s32 %s40, %s36
    %s77 = ssub.s32 %s25, %s44
    %s78 = ssub.s32 %s75, %s76
    %s79 = sor.u32 %s77, %s78
    %p80 = scmp.eq.s32.totalorder %s79, 0
    %s82 = sadd.s32 %s81, 1
    %s83 = scalar_select %p80, %s81, %s82
    %p86 = pneg %p80
    %p87 = scmp.eq.s32.totalorder %s18, 3
    %p88 = por %p86, %p87
    %p89 = scmp.ne.s32.totalorder %s81, %s84
    %p90 = scmp.eq.s32.totalorder %s18, 0
    %p91 = por %p89, %p90
    %p92 = scmp.ne.s32.totalorder %s81, %s84
    %p93 = scmp.eq.s32.totalorder %s23, 3
    %p94 = por %p92, %p93
    %p95 = scmp.ne.s32.totalorder %s84, %s85
    %p96 = scmp.eq.s32.totalorder %s23, 0
    %p97 = por %p95, %p96
    %p98 = scmp.ne.s32.totalorder %s84, %s85
    %p99 = scmp.eq.s32.totalorder %s24, 3
    %p100 = por %p98, %p99
    %p102 = scmp.ne.s32.totalorder %s85, %s101
    %p103 = scmp.eq.s32.totalorder %s24, 0
    %p104 = por %p102, %p103
    %s106 = sadd.s32 %s105, 1
    %p109 = scmp.eq.s32.totalorder %s18, 3
    %p110 = scmp.ne.s32.totalorder %s105, %s107
    %p111 = scmp.eq.s32.totalorder %s18, 0
    %p112 = por %p110, %p111
    %p113 = scmp.ne.s32.totalorder %s105, %s107
    %p114 = scmp.eq.s32.totalorder %s23, 3
    %p115 = por %p113, %p114
    %p116 = scmp.ne.s32.totalorder %s107, %s108
    %p117 = scmp.eq.s32.totalorder %s23, 0
    %p118 = por %p116, %p117
    %p119 = scmp.ne.s32.totalorder %s107, %s108
    %p120 = scmp.eq.s32.totalorder %s24, 3
    %p121 = por %p119, %p120
    %p123 = scmp.ne.s32.totalorder %s108, %s122
    %p124 = scmp.eq.s32.totalorder %s24, 0
    %p125 = por %p123, %p124
    %s127 = sadd.s32 %s126, 1
    %p130 = scmp.eq.s32.totalorder %s18, 3
    %p131 = scmp.ne.s32.totalorder %s126, %s128
    %p132 = scmp.eq.s32.totalorder %s18, 0
    %p133 = por %p131, %p132
    %p134 = scmp.ne.s32.totalorder %s126, %s128
    %p135 = scmp.eq.s32.totalorder %s23, 3
    %p136 = por %p134, %p135
    %p137 = scmp.ne.s32.totalorder %s128, %s129
    %p138 = scmp.eq.s32.totalorder %s23, 0
    %p139 = por %p137, %p138
    %p140 = scmp.ne.s32.totalorder %s128, %s129
    %p141 = scmp.eq.s32.totalorder %s24, 3
    %p142 = por %p140, %p141
    %p144 = scmp.ne.s32.totalorder %s129, %s143
    %p145 = scmp.eq.s32.totalorder %s24, 0
    %p146 = por %p144, %p145
    %s148 = sadd.s32 %s147, 1
    %p151 = scmp.eq.s32.totalorder %s18, 3
    %p152 = scmp.ne.s32.totalorder %s147, %s149
    %p153 = scmp.eq.s32.totalorder %s18, 0
    %p154 = por %p152, %p153
    %p155 = scmp.ne.s32.totalorder %s147, %s149
    %p156 = scmp.eq.s32.totalorder %s23, 3
    %p157 = por %p155, %p156
    %p158 = scmp.ne.s32.totalorder %s149, %s150
    %p159 = scmp.eq.s32.totalorder %s23, 0
    %p160 = por %p158, %p159
    %p161 = scmp.ne.s32.totalorder %s149, %s150
    %p162 = scmp.eq.s32.totalorder %s24, 3
    %p163 = por %p161, %p162
    %p165 = scmp.ne.s32.totalorder %s150, %s164
    %p166 = scmp.eq.s32.totalorder %s24, 0
    %p167 = por %p165, %p166
    %s169 = sadd.s32 %s168, 1
    %p172 = scmp.eq.s32.totalorder %s18, 3
    %p173 = scmp.ne.s32.totalorder %s168, %s170
    %p174 = scmp.eq.s32.totalorder %s18, 0
    %p175 = por %p173, %p174
    %p176 = scmp.ne.s32.totalorder %s168, %s170
    %p177 = scmp.eq.s32.totalorder %s23, 3
    %p178 = por %p176, %p177
    %p179 = scmp.ne.s32.totalorder %s170, %s171
    %p180 = scmp.eq.s32.totalorder %s23, 0
    %p181 = por %p179, %p180
    %p182 = scmp.ne.s32.totalorder %s170, %s171
    %p183 = scmp.eq.s32.totalorder %s24, 3
    %p184 = por %p182, %p183
    %p186 = scmp.ne.s32.totalorder %s171, %s185
    %p187 = scmp.eq.s32.totalorder %s24, 0
    %p188 = por %p186, %p187
    %s190 = sadd.s32 %s189, 1
    %p193 = scmp.eq.s32.totalorder %s18, 3
    %p194 = scmp.ne.s32.totalorder %s189, %s191
    %p195 = scmp.eq.s32.totalorder %s18, 0
    %p196 = por %p194, %p195
    %p197 = scmp.ne.s32.totalorder %s189, %s191
    %p198 = scmp.eq.s32.totalorder %s23, 3
    %p199 = por %p197, %p198
    %p200 = scmp.ne.s32.totalorder %s191, %s192
    %p201 = scmp.eq.s32.totalorder %s23, 0
    %p202 = por %p200, %p201
    %p203 = scmp.ne.s32.totalorder %s191, %s192
    %p204 = scmp.eq.s32.totalorder %s24, 3
    %p205 = por %p203, %p204
    %p207 = scmp.ne.s32.totalorder %s192, %s206
    %p208 = scmp.eq.s32.totalorder %s24, 0
    %p209 = por %p207, %p208
    %s211 = sadd.s32 %s210, 1
    %p214 = scmp.eq.s32.totalorder %s18, 3
    %p215 = scmp.ne.s32.totalorder %s210, %s212
    %p216 = scmp.eq.s32.totalorder %s18, 0
    %p217 = por %p215, %p216
    %p218 = scmp.ne.s32.totalorder %s210, %s212
    %p219 = scmp.eq.s32.totalorder %s23, 3
    %p220 = por %p218, %p219
    %p221 = scmp.ne.s32.totalorder %s212, %s213
    %p222 = scmp.eq.s32.totalorder %s23, 0
    %p223 = por %p221, %p222
    %p224 = scmp.ne.s32.totalorder %s212, %s213
    %p225 = scmp.eq.s32.totalorder %s24, 3
    %p226 = por %p224, %p225
    %p228 = scmp.ne.s32.totalorder %s213, %s227
    %p229 = scmp.eq.s32.totalorder %s24, 0
    %p230 = por %p228, %p229
    %s231 = ssub.s32 %s25, %s44
    %s232 = ssub.s32 %s26, %s40
    %s233 = sor.u32 %s231, %s232
    %p234 = scmp.eq.s32.totalorder %s233, 0
    %s236 = sadd.s32 %s235, 1
    %s237 = scalar_select %p234, %s235, %s236
    %p240 = pneg %p234
    %p241 = scmp.eq.s32.totalorder %s18, 3
    %p242 = por %p240, %p241
    %p243 = scmp.ne.s32.totalorder %s235, %s238
    %p244 = scmp.eq.s32.totalorder %s18, 0
    %p245 = por %p243, %p244
    %p246 = scmp.ne.s32.totalorder %s235, %s238
    %p247 = scmp.eq.s32.totalorder %s23, 3
    %p248 = por %p246, %p247
    %p249 = scmp.ne.s32.totalorder %s238, %s239
    %p250 = scmp.eq.s32.totalorder %s23, 0
    %p251 = por %p249, %p250
    %p252 = scmp.ne.s32.totalorder %s238, %s239
    %p253 = scmp.eq.s32.totalorder %s24, 3
    %p254 = por %p252, %p253
    %p256 = scmp.ne.s32.totalorder %s239, %s255
    %p257 = scmp.eq.s32.totalorder %s24, 0
    %p258 = por %p256, %p257
    %s259 = ssub.s32 %s25, %s44
    %s260 = ssub.s32 %s26, %s40
    %s261 = sor.u32 %s259, %s260
    %p262 = scmp.eq.s32.totalorder %s261, 0
    %s264 = sadd.s32 %s263, 1
    %s265 = scalar_select %p262, %s263, %s264
    %p268 = pneg %p262
    %p269 = scmp.eq.s32.totalorder %s18, 3
    %p270 = por %p268, %p269
    %p271 = scmp.ne.s32.totalorder %s263, %s266
    %p272 = scmp.eq.s32.totalorder %s18, 0
    %p273 = por %p271, %p272
    %p274 = scmp.ne.s32.totalorder %s263, %s266
    %p275 = scmp.eq.s32.totalorder %s23, 3
    %p276 = por %p274, %p275
    %p277 = scmp.ne.s32.totalorder %s266, %s267
    %p278 = scmp.eq.s32.totalorder %s23, 0
    %p279 = por %p277, %p278
    %p280 = scmp.ne.s32.totalorder %s266, %s267
    %p281 = scmp.eq.s32.totalorder %s24, 3
    %p282 = por %p280, %p281
    %p284 = scmp.ne.s32.totalorder %s267, %s283
    %p285 = scmp.eq.s32.totalorder %s24, 0
    %p286 = por %p284, %p285
    %s287 = ssub.s32 %s25, %s44
    %s288 = ssub.s32 %s26, %s40
    %s289 = sor.u32 %s287, %s288
    %p290 = scmp.eq.s32.totalorder %s289, 0
    %s292 = sadd.s32 %s291, 1
    %s293 = scalar_select %p290, %s291, %s292
    %p296 = pneg %p290
    %p297 = scmp.eq.s32.totalorder %s18, 3
    %p298 = por %p296, %p297
    %p299 = scmp.ne.s32.totalorder %s291, %s294
    %p300 = scmp.eq.s32.totalorder %s18, 0
    %p301 = por %p299, %p300
    %p302 = scmp.ne.s32.totalorder %s291, %s294
    %p303 = scmp.eq.s32.totalorder %s23, 3
    %p304 = por %p302, %p303
    %p305 = scmp.ne.s32.totalorder %s294, %s295
    %p306 = scmp.eq.s32.totalorder %s23, 0
    %p307 = por %p305, %p306
    %p308 = scmp.ne.s32.totalorder %s294, %s295
    %p309 = scmp.eq.s32.totalorder %s24, 3
    %p310 = por %p308, %p309
    %p312 = scmp.ne.s32.totalorder %s295, %s311
    %p313 = scmp.eq.s32.totalorder %s24, 0
    %p314 = por %p312, %p313
    %s315 = ssub.s32 %s25, %s44
    %s316 = ssub.s32 %s26, %s40
    %s317 = sor.u32 %s315, %s316
    %p318 = scmp.eq.s32.totalorder %s317, 0
    %s320 = sadd.s32 %s319, 1
    %s321 = scalar_select %p318, %s319, %s320
    %p324 = pneg %p318
    %p325 = scmp.eq.s32.totalorder %s18, 3
    %p326 = por %p324, %p325
    %p327 = scmp.ne.s32.totalorder %s319, %s322
    %p328 = scmp.eq.s32.totalorder %s18, 0
    %p329 = por %p327, %p328
    %p330 = scmp.ne.s32.totalorder %s319, %s322
    %p331 = scmp.eq.s32.totalorder %s23, 3
    %p332 = por %p330, %p331
    %p333 = scmp.ne.s32.totalorder %s322, %s323
    %p334 = scmp.eq.s32.totalorder %s23, 0
    %p335 = por %p333, %p334
    %p336 = scmp.ne.s32.totalorder %s322, %s323
    %p337 = scmp.eq.s32.totalorder %s24, 3
    %p338 = por %p336, %p337
    %p340 = scmp.ne.s32.totalorder %s323, %s339
    %p341 = scmp.eq.s32.totalorder %s24, 0
    %p342 = por %p340, %p341
    %p343 = scmp.le.s32.totalorder 1, %s18
    %p344 = scmp.lt.s32.totalorder %s18, 5
    %p345 = pnand %p343, %p344
    %p346 = pneg %p345
    // Predicated region
    $region9: #{_encoder_cls_call.1} parent=5 // pred_check
      _
    $region10: #{_encoder_cls_call.1} parent=5 // pred_check_branch
      %348 = sbr.rel (%p345) target = $region12
    $region11: #{_encoder_cls_call.1} parent=5 // pred_region
      %s349 = ssub.s32 %s18, 1
      // Predicated region
      $region13: #{_encoder_cls_call.1} parent=11 // pred_check
        %p350 = pneg %p118
      $region14: #{_encoder_cls_call.1} parent=11 // pred_check_branch
        %352 = sbr.rel (%p350) target = $region16
      $region15: #{_encoder_cls_call.1} parent=11 // pred_region
        _
      $region16: #{_encoder_cls_call.1} parent=11 // pred_fallthru
        _
      // Predicated region
      $region17: #{_encoder_cls_call.1} parent=11 // pred_check
        %p353 = pneg %p139
      $region18: #{_encoder_cls_call.1} parent=11 // pred_check_branch
        %355 = sbr.rel (%p353) target = $region20
      $region19: #{_encoder_cls_call.1} parent=11 // pred_region
        _
      $region20: #{_encoder_cls_call.1} parent=11 // pred_fallthru
        _
      // Predicated region
      $region21: #{_encoder_cls_call.1} parent=11 // pred_check
        %p356 = pneg %p160
      $region22: #{_encoder_cls_call.1} parent=11 // pred_check_branch
        %358 = sbr.rel (%p356) target = $region24
      $region23: #{_encoder_cls_call.1} parent=11 // pred_region
        _
      $region24: #{_encoder_cls_call.1} parent=11 // pred_fallthru
        _
      // Predicated region
      $region25: #{_encoder_cls_call.1} parent=11 // pred_check
        %p359 = pneg %p181
      $region26: #{_encoder_cls_call.1} parent=11 // pred_check_branch
        %361 = sbr.rel (%p359) target = $region28
      $region27: #{_encoder_cls_call.1} parent=11 // pred_region
        _
      $region28: #{_encoder_cls_call.1} parent=11 // pred_fallthru
        _
      // Predicated region
      $region29: #{_encoder_cls_call.1} parent=11 // pred_check
        %p362 = pneg %p202
      $region30: #{_encoder_cls_call.1} parent=11 // pred_check_branch
        %364 = sbr.rel (%p362) target = $region32
      $region31: #{_encoder_cls_call.1} parent=11 // pred_region
        _
      $region32: #{_encoder_cls_call.1} parent=11 // pred_fallthru
        _
      // Predicated region
      $region33: #{_encoder_cls_call.1} parent=11 // pred_check
        %p365 = pneg %p223
      $region34: #{_encoder_cls_call.1} parent=11 // pred_check_branch
        %367 = sbr.rel (%p365) target = $region36
      $region35: #{_encoder_cls_call.1} parent=11 // pred_region
        _
      $region36: #{_encoder_cls_call.1} parent=11 // pred_fallthru
        _
    $region12: #{_encoder_cls_call.1} parent=5 // pred_fallthru
      _
    %p368 = scmp.lt.s32.totalorder %s18, 4
    // Predicated region
    $region37: #{_encoder_cls_call.1} parent=5 // pred_check
      %p369 = pneg %p368
    $region38: #{_encoder_cls_call.1} parent=5 // pred_check_branch
      %371 = sbr.rel (%p369) target = $region40
    $region39: #{_encoder_cls_call.1} parent=5 // pred_region
      // Predicated region
      $region41: #{_encoder_cls_call.1} parent=39 // pred_check
        %p372 = pneg %p61
      $region42: #{_encoder_cls_call.1} parent=39 // pred_check_branch
        %374 = sbr.rel (%p372) target = $region44
      $region43: #{_encoder_cls_call.1} parent=39 // pred_region
        %s375 = sadd.s32 %s26, %s27
        %p376 = scmp.lt.s32.totalorder %s25, 1
        %s377 = scalar_select %p376, %s25, 1
        %p378 = scmp.lt.s32.totalorder %s375, 1
        %s379 = scalar_select %p378, %s375, 1
        %s380 = smul.addr %s377, 2
        %s381 = sadd.s32 %s379, %s380
        %s382 = smul.addr %s381, 8
        %s383 = scalar_lea.vmem %s0, %s382
        %s384 = sadd.s32 %s26, %s27
      $region44: #{_encoder_cls_call.1} parent=39 // pred_fallthru
        _
      // Predicated region
      $region45: #{_encoder_cls_call.1} parent=39 // pred_check
        %p385 = pneg %p91
      $region46: #{_encoder_cls_call.1} parent=39 // pred_check_branch
        %387 = sbr.rel (%p385) target = $region48
      $region47: #{_encoder_cls_call.1} parent=39 // pred_region
        %s388 = sadd.s32 %s26, %s27
        %p389 = scmp.lt.s32.totalorder %s25, 1
        %s390 = scalar_select %p389, %s25, 1
        %p391 = scmp.lt.s32.totalorder %s388, 1
        %s392 = scalar_select %p391, %s388, 1
        %s393 = smul.addr %s390, 2
        %s394 = sadd.s32 %s392, %s393
        %s395 = scalar_lea.vmem %s1, %s394
        %s396 = sadd.s32 %s26, %s27
      $region48: #{_encoder_cls_call.1} parent=39 // pred_fallthru
        _
    $region40: #{_encoder_cls_call.1} parent=5 // pred_fallthru
      _
    %p397 = scmp.le.s32.totalorder 1, %s18
    %p398 = scmp.lt.s32.totalorder %s18, 5
    %p399 = pnand %p397, %p398
    %p400 = pneg %p399
    // Predicated region
    $region49: #{_encoder_cls_call.1} parent=5 // pred_check
      _
    $region50: #{_encoder_cls_call.1} parent=5 // pred_check_branch
      %402 = sbr.rel (%p399) target = $region52
    $region51: #{_encoder_cls_call.1} parent=5 // pred_region
      %s403 = ssub.s32 %s18, 1
      %s404 = sadd.s32 %s29, %s30
      %p405 = scmp.lt.s32.totalorder %s28, 1
      %s406 = scalar_select %p405, %s28, 1
      %p407 = scmp.lt.s32.totalorder %s404, 1
      %s408 = scalar_select %p407, %s404, 1
      %s409 = smul.addr %s406, 2
      %s410 = sadd.s32 %s408, %s409
      %s411 = smul.addr %s410, 8
      %s412 = scalar_lea.vmem %s0, %s411
      %p413 = pneg %p67
      %p414 = pneg %p64
      %s415 = sadd.s32 %s29, %s30
      %p416 = scmp.lt.s32.totalorder %s28, 1
      %s417 = scalar_select %p416, %s28, 1
      %p418 = scmp.lt.s32.totalorder %s415, 1
      %s419 = scalar_select %p418, %s415, 1
      %s420 = smul.addr %s417, 2
      %s421 = sadd.s32 %s419, %s420
      %s422 = scalar_lea.vmem %s1, %s421
      %p423 = pneg %p97
      %p424 = pneg %p94
      %p425 = pneg %p118
      %p426 = pneg %p115
      %p427 = pneg %p139
      %p428 = pneg %p136
      %p429 = pneg %p160
      %p430 = pneg %p157
      %p431 = pneg %p181
      %p432 = pneg %p178
      %p433 = pneg %p202
      %p434 = pneg %p199
      %p435 = pneg %p223
      %p436 = pneg %p220
      %p437 = pneg %p251
      %p438 = pneg %p248
      %p439 = scmp.lt.s32.totalorder %s28, 1
      %s440 = scalar_select %p439, %s28, 1
      %p441 = scmp.lt.s32.totalorder %s29, 1
      %s442 = scalar_select %p441, %s29, 1
      %s443 = smul.addr %s440, 2
      %s444 = sadd.s32 %s442, %s443
      %s445 = smul.addr %s444, 8
      %s446 = scalar_lea.vmem %s8, %s445
      %p447 = pneg %p279
      %p448 = pneg %p276
      %p449 = scmp.lt.s32.totalorder %s28, 1
      %s450 = scalar_select %p449, %s28, 1
      %p451 = scmp.lt.s32.totalorder %s29, 1
      %s452 = scalar_select %p451, %s29, 1
      %s453 = smul.addr %s450, 2
      %s454 = sadd.s32 %s452, %s453
      %s455 = smul.addr %s454, 8
      %s456 = scalar_lea.vmem %s9, %s455
      %p457 = pneg %p307
      %p458 = pneg %p304
      %p459 = scmp.lt.s32.totalorder %s28, 1
      %s460 = scalar_select %p459, %s28, 1
      %p461 = scmp.lt.s32.totalorder %s29, 1
      %s462 = scalar_select %p461, %s29, 1
      %s463 = smul.addr %s460, 2
      %s464 = sadd.s32 %s462, %s463
      %s465 = smul.addr %s464, 8
      %s466 = scalar_lea.vmem %s10, %s465
      %p467 = pneg %p335
      %p468 = pneg %p332
      %p469 = scmp.lt.s32.totalorder %s28, 1
      %s470 = scalar_select %p469, %s28, 1
      %p471 = scmp.lt.s32.totalorder %s29, 1
      %s472 = scalar_select %p471, %s29, 1
      %s473 = smul.addr %s470, 2
      %s474 = sadd.s32 %s472, %s473
      %s475 = smul.addr %s474, 8
      %s476 = scalar_lea.vmem %s11, %s475
      %s477 = sadd.s32 %s29, %s30
      %p478 = scmp.lt.s32.totalorder %s28, 1
      %s479 = scalar_select %p478, %s28, 1
      %p480 = scmp.lt.s32.totalorder %s477, 1
      %s481 = scalar_select %p480, %s477, 1
      %s482 = smul.addr %s479, 2
      %s483 = sadd.s32 %s481, %s482
      %s484 = smul.addr %s483, 8
      %s485 = scalar_lea.vmem %s0, %s484
      %s486 = sadd.s32 %s29, %s30
      %s487 = sadd.s32 %s29, %s30
      %p488 = scmp.lt.s32.totalorder %s28, 1
      %s489 = scalar_select %p488, %s28, 1
      %p490 = scmp.lt.s32.totalorder %s487, 1
      %s491 = scalar_select %p490, %s487, 1
      %s492 = smul.addr %s489, 2
      %s493 = sadd.s32 %s491, %s492
      %s494 = scalar_lea.vmem %s1, %s493
      %s495 = sadd.s32 %s29, %s30
      %p496 = scmp.lt.s32.totalorder %s28, 1
      %s497 = scalar_select %p496, %s28, 1
      %p498 = scmp.lt.s32.totalorder %s29, 1
      %s499 = scalar_select %p498, %s29, 1
      %s500 = smul.addr %s497, 2
      %s501 = sadd.s32 %s499, %s500
      %s502 = smul.addr %s501, 8
      %s503 = scalar_lea.vmem %s8, %s502
      %p504 = scmp.lt.s32.totalorder %s28, 1
      %s505 = scalar_select %p504, %s28, 1
      %p506 = scmp.lt.s32.totalorder %s29, 1
      %s507 = scalar_select %p506, %s29, 1
      %s508 = smul.addr %s505, 2
      %s509 = sadd.s32 %s507, %s508
      %s510 = smul.addr %s509, 8
      %s511 = scalar_lea.vmem %s9, %s510
      %p512 = scmp.lt.s32.totalorder %s28, 1
      %s513 = scalar_select %p512, %s28, 1
      %p514 = scmp.lt.s32.totalorder %s29, 1
      %s515 = scalar_select %p514, %s29, 1
      %s516 = smul.addr %s513, 2
      %s517 = sadd.s32 %s515, %s516
      %s518 = smul.addr %s517, 8
      %s519 = scalar_lea.vmem %s10, %s518
      %p520 = scmp.lt.s32.totalorder %s28, 1
      %s521 = scalar_select %p520, %s28, 1
      %p522 = scmp.lt.s32.totalorder %s29, 1
      %s523 = scalar_select %p522, %s29, 1
      %s524 = smul.addr %s521, 2
      %s525 = sadd.s32 %s523, %s524
      %s526 = smul.addr %s525, 8
      %s527 = scalar_lea.vmem %s11, %s526
      %p528 = scmp.eq.s32.totalorder %s30, 0
      // Predicated region
      $region53: #{_encoder_cls_call.1} parent=51 // pred_check
        %p529 = pneg %p528
      $region54: #{_encoder_cls_call.1} parent=51 // pred_check_branch
        %531 = sbr.rel (%p529) target = $region56
      $region55: #{_encoder_cls_call.1} parent=51 // pred_region
        %532 = vst [vmem:[%s503] sm:$0xff] 0.0
        %533 = vst [vmem:[%s511] sm:$0xff] 0.0
        %534 = vst [vmem:[%s519] sm:$0xff] 0.0
        %535 = vst [vmem:[%s527] sm:$0xff] 0.0
      $region56: #{_encoder_cls_call.1} parent=51 // pred_fallthru
        _
      %v536 = vld [vmem:[%s485] sm:$0xff]
      %v537 = vld [vmem:[%s2] sm:$0xff]
      %v538 = vld [vmem:[%s3] sm:$0xff]
      %540 = vset.pattern.permute.xlu0 0
      %541 = vperm.xlu0 %540, %v538
      %v542 = vpop.permute.xlu0 %541
      %vm544 = vcmask 64512
      %v546 = vsel %vm544, %v537, 0
      %548 = vmatprep.subr.mxu0 0.0
      %549 = vmatpush1.msra.mxu0 %v536
      %550 = vmatprep.subr.mxu0 0.0
      %551 = vmatpush1.msra.mxu0 0.0
      %552 = vmatprep.subr.mxu0 0.0
      %553 = vmatpush1.msra.mxu0 0.0
      %554 = vmatprep.subr.mxu0 0.0
      %555 = vmatpush1.msra.mxu0 0.0
      %556 = vmatprep.subr.mxu0 0.0
      %557 = vmatpush1.msra.mxu0 0.0
      %558 = vmatprep.subr.mxu0 0.0
      %559 = vmatpush1.msra.mxu0 0.0
      %560 = vmatprep.subr.mxu0 0.0
      %561 = vmatpush1.msra.mxu0 0.0
      %562 = vmatprep.subr.mxu0 0.0
      %563 = vmatpush1.msra.mxu0 0.0
      %564 = vmatprep.subr.mxu0 0.0
      %565 = vmatpush1.msra.mxu0 0.0
      %566 = vmatprep.subr.mxu0 0.0
      %567 = vmatpush1.msra.mxu0 0.0
      %568 = vmatprep.subr.mxu0 0.0
      %569 = vmatpush1.msra.mxu0 0.0
      %570 = vmatprep.subr.mxu0 0.0
      %571 = vmatpush1.msra.mxu0 0.0
      %572 = vmatprep.subr.mxu0 0.0
      %573 = vmatpush1.msra.mxu0 0.0
      %574 = vmatprep.subr.mxu0 0.0
      %575 = vmatpush1.msra.mxu0 0.0
      %576 = vmatprep.subr.mxu0 0.0
      %577 = vmatpush1.msra.mxu0 0.0
      %578 = vmatprep.subr.mxu0 0.0
      %579 = vmatpush1.msra.mxu0 0.0
      %580 = vmatprep.subr.mxu0 0.0
      %581 = vmatpush1.msra.mxu0 0.0
      %582 = vmatprep.subr.mxu0 0.0
      %583 = vmatpush1.msra.mxu0 0.0
      %584 = vmatprep.subr.mxu0 0.0
      %585 = vmatpush1.msra.mxu0 0.0
      %586 = vmatprep.subr.mxu0 0.0
      %587 = vmatpush1.msra.mxu0 0.0
      %588 = vmatprep.subr.mxu0 0.0
      %589 = vmatpush1.msra.mxu0 0.0
      %590 = vmatprep.subr.mxu0 0.0
      %591 = vmatpush1.msra.mxu0 0.0
      %592 = vmatprep.subr.mxu0 0.0
      %593 = vmatpush1.msra.mxu0 0.0
      %594 = vmatprep.subr.mxu0 0.0
      %595 = vmatpush1.msra.mxu0 0.0
      %596 = vmatprep.subr.mxu0 0.0
      %597 = vmatpush1.msra.mxu0 0.0
      %598 = vmatprep.subr.mxu0 0.0
      %599 = vmatpush1.msra.mxu0 0.0
      %600 = vmatprep.subr.mxu0 0.0
      %601 = vmatpush1.msra.mxu0 0.0
      %602 = vmatprep.subr.mxu0 0.0
      %603 = vmatpush1.msra.mxu0 0.0
      %604 = vmatprep.subr.mxu0 0.0
      %605 = vmatpush1.msra.mxu0 0.0
      %606 = vmatprep.subr.mxu0 0.0
      %607 = vmatpush1.msra.mxu0 0.0
      %608 = vmatprep.subr.mxu0 0.0
      %609 = vmatpush1.msra.mxu0 0.0
      %610 = vmatprep.subr.mxu0 0.0
      %611 = vmatpush1.msra.mxu0 0.0
      %612 = vmatprep.mubr.f32.mxu0 0.0
      %613 = vmatmul.mubr.f32.gmra.mrb[0].mxu0 %v546
      %v614 = vpop.f32.mrb[0].mxu0
      %v615 = vadd.f32 %v542, %v614
      %v616 = vpop.f32.mrb[0].mxu0
      %617 = vdwg.mxu0
      %v618 = vmax.f32 %v615, 0.0
      %v619 = vld [vmem:[%s4] sm:$0xff]
      %v620 = vld [vmem:[%s5] sm:$0xff]
      %622 = vset.pattern.permute.xlu0 0
      %623 = vperm.xlu0 %622, %v620
      %v624 = vpop.permute.xlu0 %623
      %v627 = vsel %vm544, %v619, 0
      %629 = vmatprep.subr.mxu0 0.0
      %630 = vmatpush1.msra.mxu0 %v618
      %631 = vmatprep.subr.mxu0 0.0
      %632 = vmatpush1.msra.mxu0 0.0
      %633 = vmatprep.subr.mxu0 0.0
      %634 = vmatpush1.msra.mxu0 0.0
      %635 = vmatprep.subr.mxu0 0.0
      %636 = vmatpush1.msra.mxu0 0.0
      %637 = vmatprep.subr.mxu0 0.0
      %638 = vmatpush1.msra.mxu0 0.0
      %639 = vmatprep.subr.mxu0 0.0
      %640 = vmatpush1.msra.mxu0 0.0
      %641 = vmatprep.subr.mxu0 0.0
      %642 = vmatpush1.msra.mxu0 0.0
      %643 = vmatprep.subr.mxu0 0.0
      %644 = vmatpush1.msra.mxu0 0.0
      %645 = vmatprep.subr.mxu0 0.0
      %646 = vmatpush1.msra.mxu0 0.0
      %647 = vmatprep.subr.mxu0 0.0
      %648 = vmatpush1.msra.mxu0 0.0
      %649 = vmatprep.subr.mxu0 0.0
      %650 = vmatpush1.msra.mxu0 0.0
      %651 = vmatprep.subr.mxu0 0.0
      %652 = vmatpush1.msra.mxu0 0.0
      %653 = vmatprep.subr.mxu0 0.0
      %654 = vmatpush1.msra.mxu0 0.0
      %655 = vmatprep.subr.mxu0 0.0
      %656 = vmatpush1.msra.mxu0 0.0
      %657 = vmatprep.subr.mxu0 0.0
      %658 = vmatpush1.msra.mxu0 0.0
      %659 = vmatprep.subr.mxu0 0.0
      %660 = vmatpush1.msra.mxu0 0.0
      %661 = vmatprep.subr.mxu0 0.0
      %662 = vmatpush1.msra.mxu0 0.0
      %663 = vmatprep.subr.mxu0 0.0
      %664 = vmatpush1.msra.mxu0 0.0
      %665 = vmatprep.subr.mxu0 0.0
      %666 = vmatpush1.msra.mxu0 0.0
      %667 = vmatprep.subr.mxu0 0.0
      %668 = vmatpush1.msra.mxu0 0.0
      %669 = vmatprep.subr.mxu0 0.0
      %670 = vmatpush1.msra.mxu0 0.0
      %671 = vmatprep.subr.mxu0 0.0
      %672 = vmatpush1.msra.mxu0 0.0
      %673 = vmatprep.subr.mxu0 0.0
      %674 = vmatpush1.msra.mxu0 0.0
      %675 = vmatprep.subr.mxu0 0.0
      %676 = vmatpush1.msra.mxu0 0.0
      %677 = vmatprep.subr.mxu0 0.0
      %678 = vmatpush1.msra.mxu0 0.0
      %679 = vmatprep.subr.mxu0 0.0
      %680 = vmatpush1.msra.mxu0 0.0
      %681 = vmatprep.subr.mxu0 0.0
      %682 = vmatpush1.msra.mxu0 0.0
      %683 = vmatprep.subr.mxu0 0.0
      %684 = vmatpush1.msra.mxu0 0.0
      %685 = vmatprep.subr.mxu0 0.0
      %686 = vmatpush1.msra.mxu0 0.0
      %687 = vmatprep.subr.mxu0 0.0
      %688 = vmatpush1.msra.mxu0 0.0
      %689 = vmatprep.subr.mxu0 0.0
      %690 = vmatpush1.msra.mxu0 0.0
      %691 = vmatprep.subr.mxu0 0.0
      %692 = vmatpush1.msra.mxu0 0.0
      %693 = vmatprep.mubr.f32.mxu0 0.0
      %694 = vmatmul.mubr.f32.gmra.mrb[0].mxu0 %v627
      %v695 = vpop.f32.mrb[0].mxu0
      %v696 = vadd.f32 %v624, %v695
      %v697 = vpop.f32.mrb[0].mxu0
      %698 = vdwg.mxu0
      %v699 = vmax.f32 %v696, 0.0
      %v700 = vld [vmem:[%s6] sm:$0xff]
      %v701 = vld [vmem:[%s7] sm:$0xff]
      %703 = vset.pattern.permute.xlu0 0
      %704 = vperm.xlu0 %703, %v701
      %v705 = vpop.permute.xlu0 %704
      %v708 = vsel %vm544, %v700, 0
      %710 = vmatprep.subr.mxu0 0.0
      %711 = vmatpush1.msra.mxu0 %v699
      %712 = vmatprep.subr.mxu0 0.0
      %713 = vmatpush1.msra.mxu0 0.0
      %714 = vmatprep.subr.mxu0 0.0
      %715 = vmatpush1.msra.mxu0 0.0
      %716 = vmatprep.subr.mxu0 0.0
      %717 = vmatpush1.msra.mxu0 0.0
      %718 = vmatprep.subr.mxu0 0.0
      %719 = vmatpush1.msra.mxu0 0.0
      %720 = vmatprep.subr.mxu0 0.0
      %721 = vmatpush1.msra.mxu0 0.0
      %722 = vmatprep.subr.mxu0 0.0
      %723 = vmatpush1.msra.mxu0 0.0
      %724 = vmatprep.subr.mxu0 0.0
      %725 = vmatpush1.msra.mxu0 0.0
      %726 = vmatprep.subr.mxu0 0.0
      %727 = vmatpush1.msra.mxu0 0.0
      %728 = vmatprep.subr.mxu0 0.0
      %729 = vmatpush1.msra.mxu0 0.0
      %730 = vmatprep.subr.mxu0 0.0
      %731 = vmatpush1.msra.mxu0 0.0
      %732 = vmatprep.subr.mxu0 0.0
      %733 = vmatpush1.msra.mxu0 0.0
      %734 = vmatprep.subr.mxu0 0.0
      %735 = vmatpush1.msra.mxu0 0.0
      %736 = vmatprep.subr.mxu0 0.0
      %737 = vmatpush1.msra.mxu0 0.0
      %738 = vmatprep.subr.mxu0 0.0
      %739 = vmatpush1.msra.mxu0 0.0
      %740 = vmatprep.subr.mxu0 0.0
      %741 = vmatpush1.msra.mxu0 0.0
      %742 = vmatprep.subr.mxu0 0.0
      %743 = vmatpush1.msra.mxu0 0.0
      %744 = vmatprep.subr.mxu0 0.0
      %745 = vmatpush1.msra.mxu0 0.0
      %746 = vmatprep.subr.mxu0 0.0
      %747 = vmatpush1.msra.mxu0 0.0
      %748 = vmatprep.subr.mxu0 0.0
      %749 = vmatpush1.msra.mxu0 0.0
      %750 = vmatprep.subr.mxu0 0.0
      %751 = vmatpush1.msra.mxu0 0.0
      %752 = vmatprep.subr.mxu0 0.0
      %753 = vmatpush1.msra.mxu0 0.0
      %754 = vmatprep.subr.mxu0 0.0
      %755 = vmatpush1.msra.mxu0 0.0
      %756 = vmatprep.subr.mxu0 0.0
      %757 = vmatpush1.msra.mxu0 0.0
      %758 = vmatprep.subr.mxu0 0.0
      %759 = vmatpush1.msra.mxu0 0.0
      %760 = vmatprep.subr.mxu0 0.0
      %761 = vmatpush1.msra.mxu0 0.0
      %762 = vmatprep.subr.mxu0 0.0
      %763 = vmatpush1.msra.mxu0 0.0
      %764 = vmatprep.subr.mxu0 0.0
      %765 = vmatpush1.msra.mxu0 0.0
      %766 = vmatprep.subr.mxu0 0.0
      %767 = vmatpush1.msra.mxu0 0.0
      %768 = vmatprep.subr.mxu0 0.0
      %769 = vmatpush1.msra.mxu0 0.0
      %770 = vmatprep.subr.mxu0 0.0
      %771 = vmatpush1.msra.mxu0 0.0
      %772 = vmatprep.subr.mxu0 0.0
      %773 = vmatpush1.msra.mxu0 0.0
      %774 = vmatprep.mubr.f32.mxu0 0.0
      %775 = vmatmul.mubr.f32.gmra.mrb[0].mxu0 %v708
      %v776 = vpop.f32.mrb[0].mxu0
      %v777 = vadd.f32 %v705, %v776
      %v778 = vpop.f32.mrb[0].mxu0
      %779 = vdwg.mxu0
      %v780 = vmax.f32 %v777, 0.0
      %v781 = vld [vmem:[%s494] sm:$0x1]
      %v782 = vunpack.c.l.bf16 %v781
      %v783 = vmax.f32 %v782, 0.0
      %v784 = vsub.f32 %v783, %v782
      %v785 = vlaneseq
      %v786 = vshrl.u32 %v785, 7
      %v787 = vsub.s32 0, %v786
      %v788 = vrot.slane %v783, %v787
      %v789 = vmul.f32 %v780, %v788
      %v790 = vlaneseq
      %v791 = vshrl.u32 %v790, 7
      %v792 = vsub.s32 0, %v791
      %v793 = vrot.slane %v784, %v792
      %v794 = vmul.f32 %v780, %v793
      %v795 = vadd.f32 %v789, 0.0
      %v796 = vmul.f32 %v789, %v780
      %v797 = vadd.f32 %v796, 0.0
      %v798 = vadd.f32 %v794, 0.0
      %v799 = vmul.f32 %v794, %v780
      %v800 = vadd.f32 %v799, 0.0
      %v801 = vld [vmem:[%s503] sm:$0xff]
      %v802 = vadd.f32 %v801, %v795
      %803 = vst [vmem:[%s503] sm:$0xff] %v802
      %v804 = vld [vmem:[%s511] sm:$0xff]
      %v805 = vadd.f32 %v804, %v797
      %806 = vst [vmem:[%s511] sm:$0xff] %v805
      %v807 = vld [vmem:[%s519] sm:$0xff]
      %v808 = vadd.f32 %v807, %v798
      %809 = vst [vmem:[%s519] sm:$0xff] %v808
      %v810 = vld [vmem:[%s527] sm:$0xff]
      %v811 = vadd.f32 %v810, %v800
      %812 = vst [vmem:[%s527] sm:$0xff] %v811
      %p813 = scmp.lt.s32.totalorder %s28, 1
      %s814 = scalar_select %p813, %s28, 1
      %p815 = scmp.lt.s32.totalorder %s29, 1
      %s816 = scalar_select %p815, %s29, 1
      %s817 = smul.addr %s814, 2
      %s818 = sadd.s32 %s816, %s817
      %s819 = smul.addr %s818, 8
      %s820 = scalar_lea.vmem %s8, %s819
      %p821 = scmp.lt.s32.totalorder %s28, 1
      %s822 = scalar_select %p821, %s28, 1
      %p823 = scmp.lt.s32.totalorder %s29, 1
      %s824 = scalar_select %p823, %s29, 1
      %s825 = smul.addr %s822, 2
      %s826 = sadd.s32 %s824, %s825
      %s827 = smul.addr %s826, 8
      %s828 = scalar_lea.vmem %s9, %s827
      %p829 = scmp.lt.s32.totalorder %s28, 1
      %s830 = scalar_select %p829, %s28, 1
      %p831 = scmp.lt.s32.totalorder %s29, 1
      %s832 = scalar_select %p831, %s29, 1
      %s833 = smul.addr %s830, 2
      %s834 = sadd.s32 %s832, %s833
      %s835 = smul.addr %s834, 8
      %s836 = scalar_lea.vmem %s10, %s835
      %p837 = scmp.lt.s32.totalorder %s28, 1
      %s838 = scalar_select %p837, %s28, 1
      %p839 = scmp.lt.s32.totalorder %s29, 1
      %s840 = scalar_select %p839, %s29, 1
      %s841 = smul.addr %s838, 2
      %s842 = sadd.s32 %s840, %s841
      %s843 = smul.addr %s842, 8
      %s844 = scalar_lea.vmem %s11, %s843
      // Predicated region
      $region57: #{_encoder_cls_call.1} parent=51 // pred_check
        %p845 = pneg %p248
      $region58: #{_encoder_cls_call.1} parent=51 // pred_check_branch
        %847 = sbr.rel (%p845) target = $region60
      $region59: #{_encoder_cls_call.1} parent=51 // pred_region
        _
      $region60: #{_encoder_cls_call.1} parent=51 // pred_fallthru
        _
      // Predicated region
      $region61: #{_encoder_cls_call.1} parent=51 // pred_check
        %p848 = pneg %p276
      $region62: #{_encoder_cls_call.1} parent=51 // pred_check_branch
        %850 = sbr.rel (%p848) target = $region64
      $region63: #{_encoder_cls_call.1} parent=51 // pred_region
        _
      $region64: #{_encoder_cls_call.1} parent=51 // pred_fallthru
        _
      // Predicated region
      $region65: #{_encoder_cls_call.1} parent=51 // pred_check
        %p851 = pneg %p304
      $region66: #{_encoder_cls_call.1} parent=51 // pred_check_branch
        %853 = sbr.rel (%p851) target = $region68
      $region67: #{_encoder_cls_call.1} parent=51 // pred_region
        _
      $region68: #{_encoder_cls_call.1} parent=51 // pred_fallthru
        _
      // Predicated region
      $region69: #{_encoder_cls_call.1} parent=51 // pred_check
        %p854 = pneg %p332
      $region70: #{_encoder_cls_call.1} parent=51 // pred_check_branch
        %856 = sbr.rel (%p854) target = $region72
      $region71: #{_encoder_cls_call.1} parent=51 // pred_region
        _
      $region72: #{_encoder_cls_call.1} parent=51 // pred_fallthru
        _
    $region52: #{_encoder_cls_call.1} parent=5 // pred_fallthru
      _
    %p857 = scmp.le.s32.totalorder 2, %s18
    // Predicated region
    $region73: #{_encoder_cls_call.1} parent=5 // pred_check
      %p858 = pneg %p857
    $region74: #{_encoder_cls_call.1} parent=5 // pred_check_branch
      %860 = sbr.rel (%p858) target = $region76
    $region75: #{_encoder_cls_call.1} parent=5 // pred_region
      %s861 = ssub.s32 %s18, 2
      // Predicated region
      $region77: #{_encoder_cls_call.1} parent=75 // pred_check
        %p862 = pneg %p254
      $region78: #{_encoder_cls_call.1} parent=75 // pred_check_branch
        %864 = sbr.rel (%p862) target = $region80
      $region79: #{_encoder_cls_call.1} parent=75 // pred_region
        %p865 = scmp.lt.s32.totalorder %s31, 1
        %s866 = scalar_select %p865, %s31, 1
        %p867 = scmp.lt.s32.totalorder %s32, 1
        %s868 = scalar_select %p867, %s32, 1
        %s869 = smul.addr %s866, 2
        %s870 = sadd.s32 %s868, %s869
        %s871 = smul.addr %s870, 8
        %s872 = scalar_lea.vmem %s8, %s871
      $region80: #{_encoder_cls_call.1} parent=75 // pred_fallthru
        _
      // Predicated region
      $region81: #{_encoder_cls_call.1} parent=75 // pred_check
        %p873 = pneg %p282
      $region82: #{_encoder_cls_call.1} parent=75 // pred_check_branch
        %875 = sbr.rel (%p873) target = $region84
      $region83: #{_encoder_cls_call.1} parent=75 // pred_region
        %p876 = scmp.lt.s32.totalorder %s31, 1
        %s877 = scalar_select %p876, %s31, 1
        %p878 = scmp.lt.s32.totalorder %s32, 1
        %s879 = scalar_select %p878, %s32, 1
        %s880 = smul.addr %s877, 2
        %s881 = sadd.s32 %s879, %s880
        %s882 = smul.addr %s881, 8
        %s883 = scalar_lea.vmem %s9, %s882
      $region84: #{_encoder_cls_call.1} parent=75 // pred_fallthru
        _
      // Predicated region
      $region85: #{_encoder_cls_call.1} parent=75 // pred_check
        %p884 = pneg %p310
      $region86: #{_encoder_cls_call.1} parent=75 // pred_check_branch
        %886 = sbr.rel (%p884) target = $region88
      $region87: #{_encoder_cls_call.1} parent=75 // pred_region
        %p887 = scmp.lt.s32.totalorder %s31, 1
        %s888 = scalar_select %p887, %s31, 1
        %p889 = scmp.lt.s32.totalorder %s32, 1
        %s890 = scalar_select %p889, %s32, 1
        %s891 = smul.addr %s888, 2
        %s892 = sadd.s32 %s890, %s891
        %s893 = smul.addr %s892, 8
        %s894 = scalar_lea.vmem %s10, %s893
      $region88: #{_encoder_cls_call.1} parent=75 // pred_fallthru
        _
      // Predicated region
      $region89: #{_encoder_cls_call.1} parent=75 // pred_check
        %p895 = pneg %p338
      $region90: #{_encoder_cls_call.1} parent=75 // pred_check_branch
        %897 = sbr.rel (%p895) target = $region92
      $region91: #{_encoder_cls_call.1} parent=75 // pred_region
        %p898 = scmp.lt.s32.totalorder %s31, 1
        %s899 = scalar_select %p898, %s31, 1
        %p900 = scmp.lt.s32.totalorder %s32, 1
        %s901 = scalar_select %p900, %s32, 1
        %s902 = smul.addr %s899, 2
        %s903 = sadd.s32 %s901, %s902
        %s904 = smul.addr %s903, 8
        %s905 = scalar_lea.vmem %s11, %s904
      $region92: #{_encoder_cls_call.1} parent=75 // pred_fallthru
        _
    $region76: #{_encoder_cls_call.1} parent=5 // pred_fallthru
      _
  $region6: #{_encoder_cls_call.1} parent=0 // loop_footer
    %s22 = sadd.s32 1, %s18
  $region7: #{_encoder_cls_call.1} parent=0 // loop_footer_branch
    %17 = sbr.rel target = $region3
  $region8: #{_encoder_cls_call.1} parent=0 // loop_exit
    _

</llo_original>
